<compile_context>
chip_gen: v6e
topology: v6e:2x2x1
jax: 0.10.0
libtpu: 0.0.40
codegen_flags: <defaults>
</compile_context>

<pallas_src>
import functools

import jax
import jax.numpy as jnp
from jax.experimental import pallas as pl
from jax.experimental.pallas import tpu as pltpu


# ----------------------------- small helpers --------------------------------

_LANE = 128


def _round_up(x, m):
    return ((x + m - 1) // m) * m


def _vmem_limit_bytes():
    """Scoped-VMEM limit: ~3/4 of physical VMEM (generation aware)."""
    try:
        cap = pltpu.get_tpu_info().vmem_capacity_bytes
    except Exception:            # conservative fallback = v7x physical size
        cap = 64 * 1024 * 1024
    return int(cap * 3 // 4)


_VMEM_LIMIT = _vmem_limit_bytes()


def _pick_tm(m, target=512):
    """Large M tiles (HBM roofline) but keep >=2 grid steps for megacore."""
    tm = min(target, _round_up(m, 8))
    if pl.cdiv(m, tm) == 1 and m > 16:
        tm = _round_up(pl.cdiv(m, 2), 8)
    return max(tm, 8)


def _bn_scale_bias(bn, eps=1e-5):
    gamma, beta, mean, var = bn
    scale = gamma / jnp.sqrt(var + eps)
    return scale, beta - mean * scale


# ----------------------------- Pallas kernels --------------------------------

def _mm_bias_act_kernel(x_ref, w_ref, b_ref, o_ref, *, relu):
    # (TM, K) @ (K, N) on the MXU (bf16 in, f32 acc), then bias (+ReLU).
    acc = jnp.dot(x_ref[...], w_ref[...], preferred_element_type=jnp.float32)
    out = acc + b_ref[...]
    if relu:
        out = jnp.maximum(out, 0.0)
    o_ref[...] = out.astype(o_ref.dtype)


def _mm_bias_res_relu_kernel(x_ref, w_ref, b_ref, r_ref, o_ref):
    # conv3 + bn3 + identity residual + ReLU.
    acc = jnp.dot(x_ref[...], w_ref[...], preferred_element_type=jnp.float32)
    out = acc + b_ref[...] + r_ref[...].astype(jnp.float32)
    o_ref[...] = jnp.maximum(out, 0.0).astype(o_ref.dtype)


def _mm_bias_ds_relu_kernel(x_ref, w_ref, b_ref, xd_ref, wd_ref, bd_ref, o_ref):
    # conv3 + bn3 + (downsample conv + bnd) + ReLU, all in one kernel.
    acc = jnp.dot(x_ref[...], w_ref[...], preferred_element_type=jnp.float32)
    res = jnp.dot(xd_ref[...], wd_ref[...], preferred_element_type=jnp.float32)
    out = acc + b_ref[...] + res + bd_ref[...]
    o_ref[...] = jnp.maximum(out, 0.0).astype(o_ref.dtype)


def _conv3x3_tap_kernel(x_ref, w_ref, b_ref, o_ref, acc_ref, *, ho, wo):
    # x_ref: (1, H+2, W+2, Cp) padded image resident in VMEM.
    # w_ref: (9, Cp, Np) per-tap weights (BN scale folded in).
    # Accumulate 9 shifted-window matmuls into a VMEM f32 scratch.
    cp = x_ref.shape[-1]
    acc_ref[...] = jnp.zeros_like(acc_ref)
    for ki in range(3):
        for kj in range(3):
            win = x_ref[0, ki:ki + ho, kj:kj + wo, :]
            patch = win.reshape(ho * wo, cp)
            acc_ref[...] += jnp.dot(patch, w_ref[ki * 3 + kj],
                                    preferred_element_type=jnp.float32)
    out = acc_ref[...] + b_ref[...]
    o_ref[0] = jnp.maximum(out, 0.0).astype(o_ref.dtype)


# ----------------------------- kernel wrappers --------------------------------

def fused_matmul(x2d, w, bias, *, relu=True, residual=None, downsample=None,
                 tm=None):
    """act(x2d @ w + bias [+ residual | + xd @ wd + bd]) -> bf16 (M, N)."""
    m, k = x2d.shape
    n = w.shape[1]
    if tm is None:
        tm = _pick_tm(m)
    grid = (pl.cdiv(m, tm),)            # no jnp.pad of M; partial last block
    bias2 = bias.reshape(1, n).astype(jnp.float32)

    in_specs = [
        pl.BlockSpec((tm, k), lambda i: (i, 0)),   # activations, tiled over M
        pl.BlockSpec((k, n), lambda i: (0, 0)),    # weight (BN scale folded)
        pl.BlockSpec((1, n), lambda i: (0, 0)),    # BN bias
    ]
    args = [x2d, w, bias2]

    if downsample is not None:
        xd, wd, bd = downsample
        kd = xd.shape[1]
        kernel = _mm_bias_ds_relu_kernel
        in_specs += [
            pl.BlockSpec((tm, kd), lambda i: (i, 0)),
            pl.BlockSpec((kd, n), lambda i: (0, 0)),
            pl.BlockSpec((1, n), lambda i: (0, 0)),
        ]
        args += [xd, wd, bd.reshape(1, n).astype(jnp.float32)]
    elif residual is not None:
        kernel = _mm_bias_res_relu_kernel
        in_specs.append(pl.BlockSpec((tm, n), lambda i: (i, 0)))
        args.append(residual)
    else:
        kernel = functools.partial(_mm_bias_act_kernel, relu=relu)

    return pl.pallas_call(
        kernel,
        out_shape=jax.ShapeDtypeStruct((m, n), jnp.bfloat16),
        grid_spec=pltpu.PrefetchScalarGridSpec(
            num_scalar_prefetch=0,
            grid=grid,
            in_specs=in_specs,
            out_specs=pl.BlockSpec((tm, n), lambda i: (i, 0)),
        ),
        compiler_params=pltpu.CompilerParams(
            dimension_semantics=("parallel",),
            vmem_limit_bytes=_VMEM_LIMIT),
    )(*args)


def conv3x3_bn_relu(x_nhwc, w_taps, bias, stride):
    """3x3 conv (pad=1) + BN + ReLU.

    x_nhwc: (N, H, W, Cp) bf16; w_taps: (9, Cp, Np) bf16 (BN scale folded);
    bias: (Np,) f32.  Returns (N*Ho*Wo, Np) bf16.
    """
    nb, h, w, cp = x_nhwc.shape
    np_ = w_taps.shape[-1]
    ho = (h + 2 - 3) // stride + 1
    wo = (w + 2 - 3) // stride + 1
    xp = jnp.pad(x_nhwc, ((0, 0), (1, 1), (1, 1), (0, 0)))
    hp, wp = h + 2, w + 2

    if stride == 1:
        kernel = functools.partial(_conv3x3_tap_kernel, ho=ho, wo=wo)
        bias2 = bias.reshape(1, np_).astype(jnp.float32)
        out = pl.pallas_call(
            kernel,
            out_shape=jax.ShapeDtypeStruct((nb, ho * wo, np_), jnp.bfloat16),
            grid_spec=pltpu.PrefetchScalarGridSpec(
                num_scalar_prefetch=0,
                grid=(nb,),
                in_specs=[
                    pl.BlockSpec((1, hp, wp, cp), lambda b: (b, 0, 0, 0)),
                    pl.BlockSpec((9, cp, np_), lambda b: (0, 0, 0)),
                    pl.BlockSpec((1, np_), lambda b: (0, 0)),
                ],
                out_specs=pl.BlockSpec((1, ho * wo, np_), lambda b: (b, 0, 0)),
                scratch_shapes=[pltpu.VMEM((ho * wo, np_), jnp.float32)],
            ),
            compiler_params=pltpu.CompilerParams(
                dimension_semantics=("parallel",),
                vmem_limit_bytes=_VMEM_LIMIT),
        )(xp, w_taps, bias2)
        return out.reshape(nb * ho * wo, np_)

    # TODO(synk): stride>1 falls back to materialized im2col feeding the fused
    # matmul kernel (the shifted-window kernel above assumes stride == 1).
    cols = []
    for ki in range(3):
        for kj in range(3):
            cols.append(xp[:, ki:ki + (ho - 1) * stride + 1:stride,
                           kj:kj + (wo - 1) * stride + 1:stride, :])
    patches = jnp.concatenate(cols, axis=-1).reshape(-1, 9 * cp)
    return fused_matmul(patches, w_taps.reshape(9 * cp, np_), bias, relu=True)


# ------------------------------ forward pass ----------------------------------

def bottleneck_forward(x_nchw, params, stride):
    """Pallas implementation of Bottleneck.forward (eval mode)."""
    expansion = 4
    x = jnp.transpose(x_nchw, (0, 2, 3, 1)).astype(jnp.bfloat16)   # NHWC bf16
    nb, h, w, cin = x.shape
    planes = params["w1"].shape[0]
    cout = expansion * planes
    np1 = _round_up(planes, _LANE)        # lane-dense hidden width
    npo = _round_up(cout, _LANE)          # lane-dense output width

    # conv1 (1x1) + bn1 + relu : (M, Cin) @ (Cin, np1)
    s1, b1 = _bn_scale_bias(params["bn1"])
    w1 = params["w1"].reshape(planes, cin).T * s1[None, :]
    w1 = jnp.pad(w1, ((0, 0), (0, np1 - planes))).astype(jnp.bfloat16)
    b1 = jnp.pad(b1, (0, np1 - planes))
    out1 = fused_matmul(x.reshape(-1, cin), w1, b1, relu=True)     # (M, np1)

    # conv2 (3x3, stride, pad=1) + bn2 + relu : shifted-window tap kernel
    s2, b2 = _bn_scale_bias(params["bn2"])
    w2 = params["w2"].transpose(2, 3, 1, 0).reshape(9, planes, planes)
    w2 = w2 * s2[None, None, :]
    w2 = jnp.pad(w2, ((0, 0), (0, np1 - planes),
                      (0, np1 - planes))).astype(jnp.bfloat16)
    b2 = jnp.pad(b2, (0, np1 - planes))
    out2 = conv3x3_bn_relu(out1.reshape(nb, h, w, np1), w2, b2, stride)
    ho = (h + 2 - 3) // stride + 1
    wo = (w + 2 - 3) // stride + 1

    # conv3 (1x1) + bn3 + residual + relu, fully fused in one kernel
    s3, b3 = _bn_scale_bias(params["bn3"])
    w3 = params["w3"].reshape(cout, planes).T * s3[None, :]
    w3 = jnp.pad(w3, ((0, np1 - planes), (0, npo - cout))).astype(jnp.bfloat16)
    b3 = jnp.pad(b3, (0, npo - cout))

    if stride != 1 or cin != cout:
        # downsample 1x1 conv + bnd fused into the conv3 kernel
        sd, bd = _bn_scale_bias(params["bnd"])
        wd = params["wd"].reshape(cout, cin).T * sd[None, :]
        wd = jnp.pad(wd, ((0, 0), (0, npo - cout))).astype(jnp.bfloat16)
        bd = jnp.pad(bd, (0, npo - cout))
        xd = x[:, ::stride, ::stride, :].reshape(-1, cin)
        out3 = fused_matmul(out2, w3, b3, relu=True, downsample=(xd, wd, bd))
    else:
        # identity shortcut (Cin == Cout, stride == 1)
        res = jnp.pad(x.reshape(-1, cin), ((0, 0), (0, npo - cout)))
        out3 = fused_matmul(out2, w3, b3, relu=True, residual=res)

    out3 = out3[:, :cout].reshape(nb, ho, wo, cout)
    # Dropout2d: eval-mode identity.
    return jnp.transpose(out3, (0, 3, 1, 2)).astype(jnp.float32)   # NCHW


# --------------------------- pure-JAX reference ------------------------------

def reference_forward(x, params, stride):
    def conv(x, w, s=1, p=0):
        return jax.lax.conv_general_dilated(
            x, w, (s, s), [(p, p), (p, p)],
            dimension_numbers=("NCHW", "OIHW", "NCHW"))

    def bn(x, stats):
        g, b, m, v = stats
        inv = g / jnp.sqrt(v + 1e-5)
        return x * inv[None, :, None, None] + (b - m * inv)[None, :, None, None]

    expansion = 4
    cin = x.shape[1]
    cout = expansion * params["w1"].shape[0]
    out = jax.nn.relu(bn(conv(x, params["w1"]), params["bn1"]))
    out = jax.nn.relu(bn(conv(out, params["w2"], s=stride, p=1), params["bn2"]))
    out = bn(conv(out, params["w3"]), params["bn3"])
    if stride != 1 or cin != cout:
        res = bn(conv(x, params["wd"], s=stride), params["bnd"])
    else:
        res = x
    return jax.nn.relu(out + res)


# ---------------------------------- main -------------------------------------

def _make_params(key, in_planes, planes, stride):
    expansion = 4
    cout = expansion * planes
    ks = jax.random.split(key, 8)

    def bn_stats(k, c):
        k1, k2, k3, k4 = jax.random.split(k, 4)
        gamma = 1.0 + 0.1 * jax.random.normal(k1, (c,), jnp.float32)
        beta = 0.1 * jax.random.normal(k2, (c,), jnp.float32)
        mean = 0.1 * jax.random.normal(k3, (c,), jnp.float32)
        var = 0.5 + 0.5 * jnp.abs(jax.random.normal(k4, (c,), jnp.float32))
        return (gamma, beta, mean, var)

    params = {
        "w1": 0.1 * jax.random.normal(ks[0], (planes, in_planes, 1, 1), jnp.float32),
        "bn1": bn_stats(ks[1], planes),
        "w2": 0.1 * jax.random.normal(ks[2], (planes, planes, 3, 3), jnp.float32),
        "bn2": bn_stats(ks[3], planes),
        "w3": 0.1 * jax.random.normal(ks[4], (cout, planes, 1, 1), jnp.float32),
        "bn3": bn_stats(ks[5], cout),
    }
    if stride != 1 or in_planes != cout:
        params["wd"] = 0.1 * jax.random.normal(
            ks[6], (cout, in_planes, 1, 1), jnp.float32)
        params["bnd"] = bn_stats(ks[7], cout)
    return params


if __name__ == "__main__":
    key = jax.random.PRNGKey(0)
    k_x, k_p = jax.random.split(key)

    batch, in_planes, planes, height, width, stride = 2, 4, 4, 16, 16, 1
    x = jax.random.normal(k_x, (batch, in_planes, height, width), jnp.float32)
    params = _make_params(k_p, in_planes, planes, stride)

    out = jax.block_until_ready(bottleneck_forward(x, params, stride))
    ref = jax.block_until_ready(reference_forward(x, params, stride))

    assert out.shape == ref.shape, (out.shape, ref.shape)
    # bf16 MXU inputs (vs the f32 reference) need a looser tolerance than f32.
    assert jnp.allclose(out, ref, rtol=5e-2, atol=5e-2), float(
        jnp.max(jnp.abs(out - ref)))

    print("KERNEL_OK")
</pallas_src>

<mosaic_0001>
module attributes {stable_mosaic.version = 11 : i64} {
  func.func @_mm_bias_act_kernel(%arg0: i32, %arg1: memref<256x4xbf16, #tpu.memory_space<vmem>>, %arg2: memref<4x128xbf16, #tpu.memory_space<vmem>>, %arg3: memref<1x128xf32, #tpu.memory_space<vmem>>, %arg4: memref<256x128xbf16, #tpu.memory_space<vmem>>) attributes {dimension_semantics = [#tpu.dimension_semantics<parallel>], iteration_bounds = array<i64: 2>, scalar_prefetch = 0 : i64, scratch_operands = 0 : i64, tpu.core_type = #tpu.core_type<tc>, window_params = [{transform_indices = @transform_0, window_bounds = array<i64: 256, 4>}, {pipeline_mode = #tpu.pipeline_mode<synchronous>, transform_indices = @transform_1, window_bounds = array<i64: 4, 128>}, {pipeline_mode = #tpu.pipeline_mode<synchronous>, transform_indices = @transform_2, window_bounds = array<i64: 1, 128>}, {transform_indices = @transform_3, window_bounds = array<i64: 256, 128>}]} {
    %c0 = arith.constant 0 : index
    %c0_0 = arith.constant 0 : index
    %0 = vector.load %arg1[%c0, %c0_0] : memref<256x4xbf16, #tpu.memory_space<vmem>>, vector<256x4xbf16>
    %c0_1 = arith.constant 0 : index
    %c0_2 = arith.constant 0 : index
    %1 = vector.load %arg2[%c0_1, %c0_2] : memref<4x128xbf16, #tpu.memory_space<vmem>>, vector<4x128xbf16>
    %cst = arith.constant dense<0.000000e+00> : vector<256x128xf32>
    %2 = tpu.matmul %0, %1, %cst {dimension_numbers = #tpu.dot_dimension_numbers<[1], [0], [0], [1], [0, 0, 1, 1], [], []>} : vector<256x4xbf16>, vector<4x128xbf16>, vector<256x128xf32> -> vector<256x128xf32>
    %c0_3 = arith.constant 0 : index
    %c0_4 = arith.constant 0 : index
    %3 = vector.load %arg3[%c0_3, %c0_4] : memref<1x128xf32, #tpu.memory_space<vmem>>, vector<1x128xf32>
    %4 = vector.broadcast %3 : vector<1x128xf32> to vector<256x128xf32>
    %5 = arith.addf %2, %4 : vector<256x128xf32>
    %cst_5 = arith.constant 0.000000e+00 : f32
    %6 = vector.broadcast %cst_5 : f32 to vector<256x128xf32>
    %7 = arith.maximumf %5, %6 : vector<256x128xf32>
    %8 = arith.truncf %7 : vector<256x128xf32> to vector<256x128xbf16>
    %c0_6 = arith.constant 0 : index
    %c0_7 = arith.constant 0 : index
    %9 = vector.load %arg4[%c0_6, %c0_7] : memref<256x128xbf16, #tpu.memory_space<vmem>>, vector<256x128xbf16>
    tpu.vector_store %arg4[%c0_6, %c0_7], %8 {strides = array<i32>} : memref<256x128xbf16, #tpu.memory_space<vmem>>, vector<256x128xbf16>,
    return
  }
  func.func @transform_0(%arg0: i32) -> (i32, i32) {
    %c0_i32 = arith.constant 0 : i32
    %c0_i32_0 = arith.constant 0 : i32
    return %arg0, %c0_i32 : i32, i32
  }
  func.func @transform_1(%arg0: i32) -> (i32, i32) {
    %c0_i32 = arith.constant 0 : i32
    %c0_i32_0 = arith.constant 0 : i32
    %c0_i32_1 = arith.constant 0 : i32
    return %c0_i32, %c0_i32_0 : i32, i32
  }
  func.func @transform_2(%arg0: i32) -> (i32, i32) {
    %c0_i32 = arith.constant 0 : i32
    %c0_i32_0 = arith.constant 0 : i32
    %c0_i32_1 = arith.constant 0 : i32
    return %c0_i32, %c0_i32_0 : i32, i32
  }
  func.func @transform_3(%arg0: i32) -> (i32, i32) {
    %c0_i32 = arith.constant 0 : i32
    %c0_i32_0 = arith.constant 0 : i32
    return %arg0, %c0_i32 : i32, i32
  }
}

</mosaic_0001>

<llo_original>
// kernel: tpu_custom_call.1
$region0: #{tpu_custom_call.1}
  #allocation0 [shape = 'u32[]', space=smem, size = 0x4, offset = 0x4, fixed_abs, tag = 'smem constant byte address 0x4 - core index']
  #allocation1 [shape = 'u32[144,128]{1,0:T(1,128)}', space=vmem, size = 0x12000, scoped, tag = 'internal scratch']
  %s0 = inlined_call_operand.vmem [shape: bf16[512,4], index: 0, kind: input, shape index: {}]
  %s1 = inlined_call_operand.vmem [shape: bf16[4,128], index: 1, kind: input, shape index: {}]
  %s2 = inlined_call_operand.vmem [shape: f32[1,128], index: 2, kind: input, shape index: {}]
  %s3 = inlined_call_operand.hbm [shape: bf16[512,128], index: 3, kind: output, shape index: {}]
  %s4 = sld [smem:[#allocation0]]
  $region45: #{tpu_custom_call.1} parent=0
    _
  %s6 = ssub.s32 1, %s4
  %s7 = scalar_select 0, %s6, %s4
  $region1: #{tpu_custom_call.1} parent=0
    #allocation2 [shape = 'u8[131072]{0}', space=vmem, size = 0x20000, scoped, tag = 'output window, operand 0']
    #allocation3 [shape = 's32[2]{0}', space=sflag, size = 0x8, scoped, tag = 'scoped memory for tpu_custom_call.1']
    %8 = vsyncpa [#allocation3], 0
    %s9 = scalar_lea.sflag [#allocation3], 1
    %10 = vsyncpa %s9, 0
    loop: start=0, step=1, limit=4
    $region2: #{tpu_custom_call.1} parent=1 // loop_pre_header
      _
    $region3: #{tpu_custom_call.1} parent=1 // loop_header
      %s12 = sphi 0, %s16
      %p13 = scmp.ge.s32.totalorder %s12, 4
      %s22 = sphi 0, %s24
      %s25 = sphi 0, %s22
      %s26 = sphi 0, %s25
      %s42 = sphi 0, %s26
      %s46 = sphi 0, %s46
      %s48 = sphi 0, %s46
      %s49 = sphi 0, %s48
      %s63 = sphi 0, %s49
      %s67 = sphi 0, %s67
      %s69 = sphi 0, %s67
      %s70 = sphi 0, %s69
      %s84 = sphi 0, %s70
      %s90 = sphi 0, %s92
      %s93 = sphi 0, %s90
      %s94 = sphi 0, %s93
      %s110 = sphi 0, %s94
    $region4: #{tpu_custom_call.1} parent=1 // loop_header_branch
      %15 = sbr.rel (%p13) target = $region8
    $region5: #{tpu_custom_call.1} parent=1 // loop_body
      %s17 = ssub.s32 %s12, 1
      %s18 = ssub.s32 %s12, 2
      %s19 = sadd.s32 %s12, 1
      %s20 = ssub.s32 %s12, %s19
      %p21 = scmp.eq.s32.totalorder %s20, 0
      %s23 = sadd.s32 %s22, 1
      %s24 = scalar_select %p21, %s22, %s23
      %p27 = pneg %p21
      %p28 = scmp.eq.s32.totalorder %s12, 1
      %p29 = por %p27, %p28
      %p30 = scmp.ne.s32.totalorder %s22, %s25
      %p31 = scmp.eq.s32.totalorder %s12, 0
      %p32 = por %p30, %p31
      %p33 = scmp.ne.s32.totalorder %s22, %s25
      %p34 = scmp.eq.s32.totalorder %s17, 1
      %p35 = por %p33, %p34
      %p36 = scmp.ne.s32.totalorder %s25, %s26
      %p37 = scmp.eq.s32.totalorder %s17, 0
      %p38 = por %p36, %p37
      %p39 = scmp.ne.s32.totalorder %s25, %s26
      %p40 = scmp.eq.s32.totalorder %s18, 1
      %p41 = por %p39, %p40
      %p43 = scmp.ne.s32.totalorder %s26, %s42
      %p44 = scmp.eq.s32.totalorder %s18, 0
      %p45 = por %p43, %p44
      %s47 = sadd.s32 %s46, 1
      %p50 = scmp.eq.s32.totalorder %s12, 1
      %p51 = scmp.ne.s32.totalorder %s46, %s48
      %p52 = scmp.eq.s32.totalorder %s12, 0
      %p53 = por %p51, %p52
      %p54 = scmp.ne.s32.totalorder %s46, %s48
      %p55 = scmp.eq.s32.totalorder %s17, 1
      %p56 = por %p54, %p55
      %p57 = scmp.ne.s32.totalorder %s48, %s49
      %p58 = scmp.eq.s32.totalorder %s17, 0
      %p59 = por %p57, %p58
      %p60 = scmp.ne.s32.totalorder %s48, %s49
      %p61 = scmp.eq.s32.totalorder %s18, 1
      %p62 = por %p60, %p61
      %p64 = scmp.ne.s32.totalorder %s49, %s63
      %p65 = scmp.eq.s32.totalorder %s18, 0
      %p66 = por %p64, %p65
      %s68 = sadd.s32 %s67, 1
      %p71 = scmp.eq.s32.totalorder %s12, 1
      %p72 = scmp.ne.s32.totalorder %s67, %s69
      %p73 = scmp.eq.s32.totalorder %s12, 0
      %p74 = por %p72, %p73
      %p75 = scmp.ne.s32.totalorder %s67, %s69
      %p76 = scmp.eq.s32.totalorder %s17, 1
      %p77 = por %p75, %p76
      %p78 = scmp.ne.s32.totalorder %s69, %s70
      %p79 = scmp.eq.s32.totalorder %s17, 0
      %p80 = por %p78, %p79
      %p81 = scmp.ne.s32.totalorder %s69, %s70
      %p82 = scmp.eq.s32.totalorder %s18, 1
      %p83 = por %p81, %p82
      %p85 = scmp.ne.s32.totalorder %s70, %s84
      %p86 = scmp.eq.s32.totalorder %s18, 0
      %p87 = por %p85, %p86
      %s88 = ssub.s32 %s12, %s19
      %p89 = scmp.eq.s32.totalorder %s88, 0
      %s91 = sadd.s32 %s90, 1
      %s92 = scalar_select %p89, %s90, %s91
      %p95 = pneg %p89
      %p96 = scmp.eq.s32.totalorder %s12, 1
      %p97 = por %p95, %p96
      %p98 = scmp.ne.s32.totalorder %s90, %s93
      %p99 = scmp.eq.s32.totalorder %s12, 0
      %p100 = por %p98, %p99
      %p101 = scmp.ne.s32.totalorder %s90, %s93
      %p102 = scmp.eq.s32.totalorder %s17, 1
      %p103 = por %p101, %p102
      %p104 = scmp.ne.s32.totalorder %s93, %s94
      %p105 = scmp.eq.s32.totalorder %s17, 0
      %p106 = por %p104, %p105
      %p107 = scmp.ne.s32.totalorder %s93, %s94
      %p108 = scmp.eq.s32.totalorder %s18, 1
      %p109 = por %p107, %p108
      %p111 = scmp.ne.s32.totalorder %s94, %s110
      %p112 = scmp.eq.s32.totalorder %s18, 0
      %p113 = por %p111, %p112
      %p114 = scmp.le.s32.totalorder 1, %s12
      %p115 = scmp.lt.s32.totalorder %s12, 3
      %p116 = pnand %p114, %p115
      %p117 = pneg %p116
      // Predicated region
      $region9: #{tpu_custom_call.1} parent=5 // pred_check
        _
      $region10: #{tpu_custom_call.1} parent=5 // pred_check_branch
        %119 = sbr.rel (%p116) target = $region12
      $region11: #{tpu_custom_call.1} parent=5 // pred_region
        %s120 = ssub.s32 %s12, 1
        // Predicated region
        $region13: #{tpu_custom_call.1} parent=11 // pred_check
          %p121 = pneg %p59
        $region14: #{tpu_custom_call.1} parent=11 // pred_check_branch
          %123 = sbr.rel (%p121) target = $region16
        $region15: #{tpu_custom_call.1} parent=11 // pred_region
          _
        $region16: #{tpu_custom_call.1} parent=11 // pred_fallthru
          _
        // Predicated region
        $region17: #{tpu_custom_call.1} parent=11 // pred_check
          %p124 = pneg %p80
        $region18: #{tpu_custom_call.1} parent=11 // pred_check_branch
          %126 = sbr.rel (%p124) target = $region20
        $region19: #{tpu_custom_call.1} parent=11 // pred_region
          _
        $region20: #{tpu_custom_call.1} parent=11 // pred_fallthru
          _
      $region12: #{tpu_custom_call.1} parent=5 // pred_fallthru
        _
      %p127 = scmp.lt.s32.totalorder %s12, 2
      // Predicated region
      $region21: #{tpu_custom_call.1} parent=5 // pred_check
        %p128 = pneg %p127
      $region22: #{tpu_custom_call.1} parent=5 // pred_check_branch
        %130 = sbr.rel (%p128) target = $region24
      $region23: #{tpu_custom_call.1} parent=5 // pred_region
        // Predicated region
        $region25: #{tpu_custom_call.1} parent=23 // pred_check
          %p131 = pneg %p32
        $region26: #{tpu_custom_call.1} parent=23 // pred_check_branch
          %133 = sbr.rel (%p131) target = $region28
        $region27: #{tpu_custom_call.1} parent=23 // pred_region
          %s134 = smul.u32 32, %s12
          %p135 = scmp.lt.s32.totalorder %s134, 63
          %s136 = scalar_select %p135, %s134, 63
          %s137 = smul.addr %s136, 4
          %s138 = scalar_lea.vmem %s0, %s137
          %s139 = smul.u32 32, %s12
        $region28: #{tpu_custom_call.1} parent=23 // pred_fallthru
          _
      $region24: #{tpu_custom_call.1} parent=5 // pred_fallthru
        _
      %p140 = scmp.le.s32.totalorder 1, %s12
      %p141 = scmp.lt.s32.totalorder %s12, 3
      %p142 = pnand %p140, %p141
      %p143 = pneg %p142
      // Predicated region
      $region29: #{tpu_custom_call.1} parent=5 // pred_check
        _
      $region30: #{tpu_custom_call.1} parent=5 // pred_check_branch
        %145 = sbr.rel (%p142) target = $region32
      $region31: #{tpu_custom_call.1} parent=5 // pred_region
        %s146 = ssub.s32 %s12, 1
        %s147 = smul.u32 32, %s17
        %p148 = scmp.lt.s32.totalorder %s147, 63
        %s149 = scalar_select %p148, %s147, 63
        %s150 = smul.addr %s149, 4
        %s151 = scalar_lea.vmem %s0, %s150
        %p152 = pneg %p38
        %p153 = pneg %p35
        %p154 = pneg %p59
        %p155 = pneg %p56
        %p156 = pneg %p80
        %p157 = pneg %p77
        %p158 = pneg %p106
        %p159 = pneg %p103
        %s160 = sand.u32 %s93, 1
        %s161 = scalar_lea.sflag [#allocation3], %s160
        %s162 = sand.u32 %s93, 1
        %s163 = smul.addr %s162, 128
        %s164 = scalar_lea.vmem [#allocation2], %s163
        %s165 = smul.u32 32, %s17
        %p166 = scmp.lt.s32.totalorder %s165, 63
        %s167 = scalar_select %p166, %s165, 63
        %s168 = smul.addr %s167, 4
        %s169 = scalar_lea.vmem %s0, %s168
        %s170 = smul.u32 32, %s17
        %s171 = smul.u32 32, %s17
        %v173 = vld [vmem:[%s169] sm:$0xf]
        %v174 = vld [vmem:[%s169 + $0x4] sm:$0xf]
        %v175 = vld [vmem:[%s169 + $0x8] sm:$0xf]
        %v176 = vld [vmem:[%s169 + $0xc] sm:$0xf]
        %v177 = vld [vmem:[%s169 + $0x10] sm:$0xf]
        %v178 = vld [vmem:[%s169 + $0x14] sm:$0xf]
        %v179 = vld [vmem:[%s169 + $0x18] sm:$0xf]
        %v180 = vld [vmem:[%s169 + $0x1c] sm:$0xf]
        %v181 = vld [vmem:[%s169 + $0x20] sm:$0xf]
        %v182 = vld [vmem:[%s169 + $0x24] sm:$0xf]
        %v183 = vld [vmem:[%s169 + $0x28] sm:$0xf]
        %v184 = vld [vmem:[%s169 + $0x2c] sm:$0xf]
        %v185 = vld [vmem:[%s169 + $0x30] sm:$0xf]
        %v186 = vld [vmem:[%s169 + $0x34] sm:$0xf]
        %v187 = vld [vmem:[%s169 + $0x38] sm:$0xf]
        %v188 = vld [vmem:[%s169 + $0x3c] sm:$0xf]
        %v189 = vld [vmem:[%s169 + $0x40] sm:$0xf]
        %v190 = vld [vmem:[%s169 + $0x44] sm:$0xf]
        %v191 = vld [vmem:[%s169 + $0x48] sm:$0xf]
        %v192 = vld [vmem:[%s169 + $0x4c] sm:$0xf]
        %v193 = vld [vmem:[%s169 + $0x50] sm:$0xf]
        %v194 = vld [vmem:[%s169 + $0x54] sm:$0xf]
        %v195 = vld [vmem:[%s169 + $0x58] sm:$0xf]
        %v196 = vld [vmem:[%s169 + $0x5c] sm:$0xf]
        %v197 = vld [vmem:[%s169 + $0x60] sm:$0xf]
        %v198 = vld [vmem:[%s169 + $0x64] sm:$0xf]
        %v199 = vld [vmem:[%s169 + $0x68] sm:$0xf]
        %v200 = vld [vmem:[%s169 + $0x6c] sm:$0xf]
        %v201 = vld [vmem:[%s169 + $0x70] sm:$0xf]
        %v202 = vld [vmem:[%s169 + $0x74] sm:$0xf]
        %v203 = vld [vmem:[%s169 + $0x78] sm:$0xf]
        %v204 = vld [vmem:[%s169 + $0x7c] sm:$0xf]
        %v205 = vld [vmem:[%s1] sm:$0x3]
        %v206 = vld [vmem:[%s2] sm:$0x1]
        %v208 = vlaneseq
        %v209 = vshrl.u32 %v208, 7
        %v210 = vsub.s32 0, %v209
        %v211 = vrot.slane %v206, %v210
        %v245 = vunpack.c.l.b16 %v173
        %v246 = vunpack.c.l.b16 %v174
        %v247 = vunpack.c.l.b16 %v175
        %v248 = vunpack.c.l.b16 %v176
        %v249 = vunpack.c.l.b16 %v177
        %v250 = vunpack.c.l.b16 %v178
        %v251 = vunpack.c.l.b16 %v179
        %v252 = vunpack.c.l.b16 %v180
        %v253 = vunpack.c.l.b16 %v181
        %v254 = vunpack.c.l.b16 %v182
        %v255 = vunpack.c.l.b16 %v183
        %v256 = vunpack.c.l.b16 %v184
        %v257 = vunpack.c.l.b16 %v185
        %v258 = vunpack.c.l.b16 %v186
        %v259 = vunpack.c.l.b16 %v187
        %v260 = vunpack.c.l.b16 %v188
        %v261 = vunpack.c.l.b16 %v189
        %v262 = vunpack.c.l.b16 %v190
        %v263 = vunpack.c.l.b16 %v191
        %v264 = vunpack.c.l.b16 %v192
        %v265 = vunpack.c.l.b16 %v193
        %v266 = vunpack.c.l.b16 %v194
        %v267 = vunpack.c.l.b16 %v195
        %v268 = vunpack.c.l.b16 %v196
        %v269 = vunpack.c.l.b16 %v197
        %v270 = vunpack.c.l.b16 %v198
        %v271 = vunpack.c.l.b16 %v199
        %v272 = vunpack.c.l.b16 %v200
        %v273 = vunpack.c.l.b16 %v201
        %v274 = vunpack.c.l.b16 %v202
        %v275 = vunpack.c.l.b16 %v203
        %v276 = vunpack.c.l.b16 %v204
        %v277 = vpack.c.b16 %v246, %v245
        %v278 = vpack.c.b16 %v248, %v247
        %v279 = vpack.c.b16 %v250, %v249
        %v280 = vpack.c.b16 %v252, %v251
        %v281 = vpack.c.b16 %v254, %v253
        %v282 = vpack.c.b16 %v256, %v255
        %v283 = vpack.c.b16 %v258, %v257
        %v284 = vpack.c.b16 %v260, %v259
        %v285 = vpack.c.b16 %v262, %v261
        %v286 = vpack.c.b16 %v264, %v263
        %v287 = vpack.c.b16 %v266, %v265
        %v288 = vpack.c.b16 %v268, %v267
        %v289 = vpack.c.b16 %v270, %v269
        %v290 = vpack.c.b16 %v272, %v271
        %v291 = vpack.c.b16 %v274, %v273
        %v292 = vpack.c.b16 %v276, %v275
        %vm293 = vcmask 31744
        %v295 = vsel %vm293, %v277, 0
        %v298 = vsel %vm293, %v278, 0
        %v301 = vsel %vm293, %v279, 0
        %v304 = vsel %vm293, %v280, 0
        %v307 = vsel %vm293, %v281, 0
        %v310 = vsel %vm293, %v282, 0
        %v313 = vsel %vm293, %v283, 0
        %v316 = vsel %vm293, %v284, 0
        %v319 = vsel %vm293, %v285, 0
        %v322 = vsel %vm293, %v286, 0
        %v325 = vsel %vm293, %v287, 0
        %v328 = vsel %vm293, %v288, 0
        %v331 = vsel %vm293, %v289, 0
        %v334 = vsel %vm293, %v290, 0
        %v337 = vsel %vm293, %v291, 0
        %v340 = vsel %vm293, %v292, 0
        %vm342 = vcmask 1041408
        %v344 = vsel %vm342, %v205, 0
        %346 = vmatprep.subr.bf16.mxu0 0
        %347 = vmatpush1.bf16.msra.mxu0 0
        %348 = vmatprep.subr.bf16.mxu0 0
        %349 = vmatpush1.bf16.msra.mxu0 0
        %350 = vmatprep.subr.bf16.mxu0 0
        %351 = vmatpush1.bf16.msra.mxu0 0
        %352 = vmatprep.subr.bf16.mxu0 0
        %353 = vmatpush1.bf16.msra.mxu0 0
        %354 = vmatprep.subr.bf16.mxu0 0
        %355 = vmatpush1.bf16.msra.mxu0 0
        %356 = vmatprep.subr.bf16.mxu0 0
        %357 = vmatpush1.bf16.msra.mxu0 0
        %358 = vmatprep.subr.bf16.mxu0 0
        %359 = vmatpush1.bf16.msra.mxu0 0
        %360 = vmatprep.subr.bf16.mxu0 0
        %361 = vmatpush1.bf16.msra.mxu0 %v344
        %362 = vmatprep.subr.bf16.mxu0 0
        %363 = vmatpush2.bf16.msra.mxu0 0
        %364 = vmatprep.subr.bf16.mxu0 0
        %365 = vmatpush2.bf16.msra.mxu0 0
        %366 = vmatprep.subr.bf16.mxu0 0
        %367 = vmatpush2.bf16.msra.mxu0 0
        %368 = vmatprep.subr.bf16.mxu0 0
        %369 = vmatpush2.bf16.msra.mxu0 0
        %370 = vmatprep.subr.bf16.mxu0 0
        %371 = vmatpush2.bf16.msra.mxu0 0
        %372 = vmatprep.subr.bf16.mxu0 0
        %373 = vmatpush2.bf16.msra.mxu0 0
        %374 = vmatprep.subr.bf16.mxu0 0
        %375 = vmatpush2.bf16.msra.mxu0 0
        %376 = vmatprep.subr.bf16.mxu0 0
        %377 = vmatpush2.bf16.msra.mxu0 0
        %378 = vmatprep.mubr.bf16.mxu0 0
        %379 = vmatmul.mubr.bf16.gmra.mxu0 %v295
        %v380 = vpop.f32.mrf.mxu0
        %v381 = vadd.f32 %v211, %v380
        %v382 = vpop.f32.mrf.mxu0
        %v383 = vpop.f32.mrf.mxu0
        %v384 = vadd.f32 %v211, %v383
        %v385 = vpop.f32.mrf.mxu0
        %386 = vmatprep.mubr.bf16.mxu0 0
        %387 = vmatmul.mubr.bf16.gmra.mxu0 %v298
        %v388 = vpop.f32.mrf.mxu0
        %v389 = vadd.f32 %v211, %v388
        %v390 = vpop.f32.mrf.mxu0
        %v391 = vpop.f32.mrf.mxu0
        %v392 = vadd.f32 %v211, %v391
        %v393 = vpop.f32.mrf.mxu0
        %394 = vmatprep.mubr.bf16.mxu0 0
        %395 = vmatmul.mubr.bf16.gmra.mxu0 %v301
        %v396 = vpop.f32.mrf.mxu0
        %v397 = vadd.f32 %v211, %v396
        %v398 = vpop.f32.mrf.mxu0
        %v399 = vpop.f32.mrf.mxu0
        %v400 = vadd.f32 %v211, %v399
        %v401 = vpop.f32.mrf.mxu0
        %402 = vmatprep.mubr.bf16.mxu0 0
        %403 = vmatmul.mubr.bf16.gmra.mxu0 %v304
        %v404 = vpop.f32.mrf.mxu0
        %v405 = vadd.f32 %v211, %v404
        %v406 = vpop.f32.mrf.mxu0
        %v407 = vpop.f32.mrf.mxu0
        %v408 = vadd.f32 %v211, %v407
        %v409 = vpop.f32.mrf.mxu0
        %410 = vmatprep.mubr.bf16.mxu0 0
        %411 = vmatmul.mubr.bf16.gmra.mxu0 %v307
        %v412 = vpop.f32.mrf.mxu0
        %v413 = vadd.f32 %v211, %v412
        %v414 = vpop.f32.mrf.mxu0
        %v415 = vpop.f32.mrf.mxu0
        %v416 = vadd.f32 %v211, %v415
        %v417 = vpop.f32.mrf.mxu0
        %418 = vmatprep.mubr.bf16.mxu0 0
        %419 = vmatmul.mubr.bf16.gmra.mxu0 %v310
        %v420 = vpop.f32.mrf.mxu0
        %v421 = vadd.f32 %v211, %v420
        %v422 = vpop.f32.mrf.mxu0
        %v423 = vpop.f32.mrf.mxu0
        %v424 = vadd.f32 %v211, %v423
        %v425 = vpop.f32.mrf.mxu0
        %426 = vmatprep.mubr.bf16.mxu0 0
        %427 = vmatmul.mubr.bf16.gmra.mxu0 %v313
        %v428 = vpop.f32.mrf.mxu0
        %v429 = vadd.f32 %v211, %v428
        %v430 = vpop.f32.mrf.mxu0
        %v431 = vpop.f32.mrf.mxu0
        %v432 = vadd.f32 %v211, %v431
        %v433 = vpop.f32.mrf.mxu0
        %434 = vmatprep.mubr.bf16.mxu0 0
        %435 = vmatmul.mubr.bf16.gmra.mxu0 %v316
        %v436 = vpop.f32.mrf.mxu0
        %v437 = vadd.f32 %v211, %v436
        %v438 = vpop.f32.mrf.mxu0
        %v439 = vpop.f32.mrf.mxu0
        %v440 = vadd.f32 %v211, %v439
        %v441 = vpop.f32.mrf.mxu0
        %442 = vmatprep.mubr.bf16.mxu0 0
        %443 = vmatmul.mubr.bf16.gmra.mxu0 %v319
        %v444 = vpop.f32.mrf.mxu0
        %v445 = vadd.f32 %v211, %v444
        %v446 = vpop.f32.mrf.mxu0
        %v447 = vpop.f32.mrf.mxu0
        %v448 = vadd.f32 %v211, %v447
        %v449 = vpop.f32.mrf.mxu0
        %450 = vmatprep.mubr.bf16.mxu0 0
        %451 = vmatmul.mubr.bf16.gmra.mxu0 %v322
        %v452 = vpop.f32.mrf.mxu0
        %v453 = vadd.f32 %v211, %v452
        %v454 = vpop.f32.mrf.mxu0
        %v455 = vpop.f32.mrf.mxu0
        %v456 = vadd.f32 %v211, %v455
        %v457 = vpop.f32.mrf.mxu0
        %458 = vmatprep.mubr.bf16.mxu0 0
        %459 = vmatmul.mubr.bf16.gmra.mxu0 %v325
        %v460 = vpop.f32.mrf.mxu0
        %v461 = vadd.f32 %v211, %v460
        %v462 = vpop.f32.mrf.mxu0
        %v463 = vpop.f32.mrf.mxu0
        %v464 = vadd.f32 %v211, %v463
        %v465 = vpop.f32.mrf.mxu0
        %466 = vmatprep.mubr.bf16.mxu0 0
        %467 = vmatmul.mubr.bf16.gmra.mxu0 %v328
        %v468 = vpop.f32.mrf.mxu0
        %v469 = vadd.f32 %v211, %v468
        %v470 = vpop.f32.mrf.mxu0
        %v471 = vpop.f32.mrf.mxu0
        %v472 = vadd.f32 %v211, %v471
        %v473 = vpop.f32.mrf.mxu0
        %474 = vmatprep.mubr.bf16.mxu0 0
        %475 = vmatmul.mubr.bf16.gmra.mxu0 %v331
        %v476 = vpop.f32.mrf.mxu0
        %v477 = vadd.f32 %v211, %v476
        %v478 = vpop.f32.mrf.mxu0
        %v479 = vpop.f32.mrf.mxu0
        %v480 = vadd.f32 %v211, %v479
        %v481 = vpop.f32.mrf.mxu0
        %482 = vmatprep.mubr.bf16.mxu0 0
        %483 = vmatmul.mubr.bf16.gmra.mxu0 %v334
        %v484 = vpop.f32.mrf.mxu0
        %v485 = vadd.f32 %v211, %v484
        %v486 = vpop.f32.mrf.mxu0
        %v487 = vpop.f32.mrf.mxu0
        %v488 = vadd.f32 %v211, %v487
        %v489 = vpop.f32.mrf.mxu0
        %490 = vmatprep.mubr.bf16.mxu0 0
        %491 = vmatmul.mubr.bf16.gmra.mxu0 %v337
        %v492 = vpop.f32.mrf.mxu0
        %v493 = vadd.f32 %v211, %v492
        %v494 = vpop.f32.mrf.mxu0
        %v495 = vpop.f32.mrf.mxu0
        %v496 = vadd.f32 %v211, %v495
        %v497 = vpop.f32.mrf.mxu0
        %498 = vmatprep.mubr.bf16.mxu0 0
        %499 = vmatmul.mubr.bf16.gmra.mxu0 %v340
        %v500 = vpop.f32.mrf.mxu0
        %v501 = vadd.f32 %v211, %v500
        %v502 = vpop.f32.mrf.mxu0
        %v503 = vpop.f32.mrf.mxu0
        %v504 = vadd.f32 %v211, %v503
        %v505 = vpop.f32.mrf.mxu0
        %506 = vdwg.mxu0
        %v507 = vmax.f32 %v381, 0.0
        %v508 = vmax.f32 %v384, 0.0
        %v509 = vmax.f32 %v389, 0.0
        %v510 = vmax.f32 %v392, 0.0
        %v511 = vmax.f32 %v397, 0.0
        %v512 = vmax.f32 %v400, 0.0
        %v513 = vmax.f32 %v405, 0.0
        %v514 = vmax.f32 %v408, 0.0
        %v515 = vmax.f32 %v413, 0.0
        %v516 = vmax.f32 %v416, 0.0
        %v517 = vmax.f32 %v421, 0.0
        %v518 = vmax.f32 %v424, 0.0
        %v519 = vmax.f32 %v429, 0.0
        %v520 = vmax.f32 %v432, 0.0
        %v521 = vmax.f32 %v437, 0.0
        %v522 = vmax.f32 %v440, 0.0
        %v523 = vmax.f32 %v445, 0.0
        %v524 = vmax.f32 %v448, 0.0
        %v525 = vmax.f32 %v453, 0.0
        %v526 = vmax.f32 %v456, 0.0
        %v527 = vmax.f32 %v461, 0.0
        %v528 = vmax.f32 %v464, 0.0
        %v529 = vmax.f32 %v469, 0.0
        %v530 = vmax.f32 %v472, 0.0
        %v531 = vmax.f32 %v477, 0.0
        %v532 = vmax.f32 %v480, 0.0
        %v533 = vmax.f32 %v485, 0.0
        %v534 = vmax.f32 %v488, 0.0
        %v535 = vmax.f32 %v493, 0.0
        %v536 = vmax.f32 %v496, 0.0
        %v537 = vmax.f32 %v501, 0.0
        %v538 = vmax.f32 %v504, 0.0
        %v539 = vpack.c.bf16 %v508, %v507
        %v540 = vpack.c.bf16 %v510, %v509
        %v541 = vpack.c.bf16 %v512, %v511
        %v542 = vpack.c.bf16 %v514, %v513
        %v543 = vpack.c.bf16 %v516, %v515
        %v544 = vpack.c.bf16 %v518, %v517
        %v545 = vpack.c.bf16 %v520, %v519
        %v546 = vpack.c.bf16 %v522, %v521
        %v547 = vpack.c.bf16 %v524, %v523
        %v548 = vpack.c.bf16 %v526, %v525
        %v549 = vpack.c.bf16 %v528, %v527
        %v550 = vpack.c.bf16 %v530, %v529
        %v551 = vpack.c.bf16 %v532, %v531
        %v552 = vpack.c.bf16 %v534, %v533
        %v553 = vpack.c.bf16 %v536, %v535
        %v554 = vpack.c.bf16 %v538, %v537
        %v571 = vunpack.c.l.b16 %v539
        %v572 = vunpack.c.h.b16 %v539
        %v573 = vunpack.c.l.b16 %v540
        %v574 = vunpack.c.h.b16 %v540
        %v575 = vunpack.c.l.b16 %v541
        %v576 = vunpack.c.h.b16 %v541
        %v577 = vunpack.c.l.b16 %v542
        %v578 = vunpack.c.h.b16 %v542
        %v579 = vunpack.c.l.b16 %v543
        %v580 = vunpack.c.h.b16 %v543
        %v581 = vunpack.c.l.b16 %v544
        %v582 = vunpack.c.h.b16 %v544
        %v583 = vunpack.c.l.b16 %v545
        %v584 = vunpack.c.h.b16 %v545
        %v585 = vunpack.c.l.b16 %v546
        %v586 = vunpack.c.h.b16 %v546
        %v587 = vunpack.c.l.b16 %v547
        %v588 = vunpack.c.h.b16 %v547
        %v589 = vunpack.c.l.b16 %v548
        %v590 = vunpack.c.h.b16 %v548
        %v591 = vunpack.c.l.b16 %v549
        %v592 = vunpack.c.h.b16 %v549
        %v593 = vunpack.c.l.b16 %v550
        %v594 = vunpack.c.h.b16 %v550
        %v595 = vunpack.c.l.b16 %v551
        %v596 = vunpack.c.h.b16 %v551
        %v597 = vunpack.c.l.b16 %v552
        %v598 = vunpack.c.h.b16 %v552
        %v599 = vunpack.c.l.b16 %v553
        %v600 = vunpack.c.h.b16 %v553
        %v601 = vunpack.c.l.b16 %v554
        %v602 = vunpack.c.h.b16 %v554
        %v603 = vpack.c.b16 %v571, %v571
        %v604 = vpack.c.b16 %v572, %v572
        %v605 = vpack.c.b16 %v573, %v573
        %v606 = vpack.c.b16 %v574, %v574
        %v607 = vpack.c.b16 %v575, %v575
        %v608 = vpack.c.b16 %v576, %v576
        %v609 = vpack.c.b16 %v577, %v577
        %v610 = vpack.c.b16 %v578, %v578
        %v611 = vpack.c.b16 %v579, %v579
        %v612 = vpack.c.b16 %v580, %v580
        %v613 = vpack.c.b16 %v581, %v581
        %v614 = vpack.c.b16 %v582, %v582
        %v615 = vpack.c.b16 %v583, %v583
        %v616 = vpack.c.b16 %v584, %v584
        %v617 = vpack.c.b16 %v585, %v585
        %v618 = vpack.c.b16 %v586, %v586
        %v619 = vpack.c.b16 %v587, %v587
        %v620 = vpack.c.b16 %v588, %v588
        %v621 = vpack.c.b16 %v589, %v589
        %v622 = vpack.c.b16 %v590, %v590
        %v623 = vpack.c.b16 %v591, %v591
        %v624 = vpack.c.b16 %v592, %v592
        %v625 = vpack.c.b16 %v593, %v593
        %v626 = vpack.c.b16 %v594, %v594
        %v627 = vpack.c.b16 %v595, %v595
        %v628 = vpack.c.b16 %v596, %v596
        %v629 = vpack.c.b16 %v597, %v597
        %v630 = vpack.c.b16 %v598, %v598
        %v631 = vpack.c.b16 %v599, %v599
        %v632 = vpack.c.b16 %v600, %v600
        %v633 = vpack.c.b16 %v601, %v601
        %v634 = vpack.c.b16 %v602, %v602
        %667 = vst [vmem:[%s164] sm:$0xf] %v603
        %668 = vst [vmem:[%s164 + $0x4] sm:$0xf] %v604
        %669 = vst [vmem:[%s164 + $0x8] sm:$0xf] %v605
        %670 = vst [vmem:[%s164 + $0xc] sm:$0xf] %v606
        %671 = vst [vmem:[%s164 + $0x10] sm:$0xf] %v607
        %672 = vst [vmem:[%s164 + $0x14] sm:$0xf] %v608
        %673 = vst [vmem:[%s164 + $0x18] sm:$0xf] %v609
        %674 = vst [vmem:[%s164 + $0x1c] sm:$0xf] %v610
        %675 = vst [vmem:[%s164 + $0x20] sm:$0xf] %v611
        %676 = vst [vmem:[%s164 + $0x24] sm:$0xf] %v612
        %677 = vst [vmem:[%s164 + $0x28] sm:$0xf] %v613
        %678 = vst [vmem:[%s164 + $0x2c] sm:$0xf] %v614
        %679 = vst [vmem:[%s164 + $0x30] sm:$0xf] %v615
        %680 = vst [vmem:[%s164 + $0x34] sm:$0xf] %v616
        %681 = vst [vmem:[%s164 + $0x38] sm:$0xf] %v617
        %682 = vst [vmem:[%s164 + $0x3c] sm:$0xf] %v618
        %683 = vst [vmem:[%s164 + $0x40] sm:$0xf] %v619
        %684 = vst [vmem:[%s164 + $0x44] sm:$0xf] %v620
        %685 = vst [vmem:[%s164 + $0x48] sm:$0xf] %v621
        %686 = vst [vmem:[%s164 + $0x4c] sm:$0xf] %v622
        %687 = vst [vmem:[%s164 + $0x50] sm:$0xf] %v623
        %688 = vst [vmem:[%s164 + $0x54] sm:$0xf] %v624
        %689 = vst [vmem:[%s164 + $0x58] sm:$0xf] %v625
        %690 = vst [vmem:[%s164 + $0x5c] sm:$0xf] %v626
        %691 = vst [vmem:[%s164 + $0x60] sm:$0xf] %v627
        %692 = vst [vmem:[%s164 + $0x64] sm:$0xf] %v628
        %693 = vst [vmem:[%s164 + $0x68] sm:$0xf] %v629
        %694 = vst [vmem:[%s164 + $0x6c] sm:$0xf] %v630
        %695 = vst [vmem:[%s164 + $0x70] sm:$0xf] %v631
        %696 = vst [vmem:[%s164 + $0x74] sm:$0xf] %v632
        %697 = vst [vmem:[%s164 + $0x78] sm:$0xf] %v633
        %698 = vst [vmem:[%s164 + $0x7c] sm:$0xf] %v634
        %s699 = sand.u32 %s93, 1
        %s700 = scalar_lea.sflag [#allocation3], %s699
        %s701 = sand.u32 %s93, 1
        %s702 = smul.addr %s701, 128
        %s703 = scalar_lea.vmem [#allocation2], %s702
        // Predicated region
        $region33: #{tpu_custom_call.1} parent=31 // pred_check
          %p704 = pneg %p103
        $region34: #{tpu_custom_call.1} parent=31 // pred_check_branch
          %706 = sbr.rel (%p704) target = $region36
        $region35: #{tpu_custom_call.1} parent=31 // pred_region
          %s707 = smul.u32 32, %s17
          %s709 = ssub.s32 2048, 2048
          %710 = vsyncadd %s700, %s709
          %s711 = smul.addr %s707, 64
          %s712 = scalar_lea.hbm %s3, %s711
          %s713 = sshll.u32 %s703, 4
          %s714 = int_to_ptr.vmem [resolvable:$true] %s713
          %719 = dma.vmem_to_hbm [thread:$0]  %s714, 2048, %s712, %s700, 64, 64, 4
        $region36: #{tpu_custom_call.1} parent=31 // pred_fallthru
          _
      $region32: #{tpu_custom_call.1} parent=5 // pred_fallthru
        _
      %p720 = scmp.le.s32.totalorder 2, %s12
      // Predicated region
      $region37: #{tpu_custom_call.1} parent=5 // pred_check
        %p721 = pneg %p720
      $region38: #{tpu_custom_call.1} parent=5 // pred_check_branch
        %723 = sbr.rel (%p721) target = $region40
      $region39: #{tpu_custom_call.1} parent=5 // pred_region
        %s724 = ssub.s32 %s12, 2
        // Predicated region
        $region41: #{tpu_custom_call.1} parent=39 // pred_check
          %p725 = pneg %p109
        $region42: #{tpu_custom_call.1} parent=39 // pred_check_branch
          %727 = sbr.rel (%p725) target = $region44
        $region43: #{tpu_custom_call.1} parent=39 // pred_region
          %s728 = sand.u32 %s94, 1
          %s729 = scalar_lea.sflag [#allocation3], %s728
          %s730 = sand.u32 %s94, 1
          %s731 = smul.addr %s730, 128
          %s732 = scalar_lea.vmem [#allocation2], %s731
          %733 = dma.done %s729, 2048
        $region44: #{tpu_custom_call.1} parent=39 // pred_fallthru
          _
      $region40: #{tpu_custom_call.1} parent=5 // pred_fallthru
        _
    $region6: #{tpu_custom_call.1} parent=1 // loop_footer
      %s16 = sadd.s32 1, %s12
    $region7: #{tpu_custom_call.1} parent=1 // loop_footer_branch
      %11 = sbr.rel target = $region3
    $region8: #{tpu_custom_call.1} parent=1 // loop_exit
      _
    %734 = vsyncpa [#allocation3], 1
    %s735 = scalar_lea.sflag [#allocation3], 1
    %736 = vsyncpa %s735, 1

</llo_original>
